<compile_context>
chip_gen: v7x
topology: tpu7x:2x2x1
jax: 0.10.0
libtpu: 0.0.40
codegen_flags: <defaults>
</compile_context>

<pallas_src>
import jax
import jax.numpy as jnp
from jax.experimental import pallas as pl
from jax.experimental.pallas import tpu as pltpu


# --------------------------------------------------------------------------- #
# Kernel
# --------------------------------------------------------------------------- #
def _mapper_kernel(x_ref, w1_ref, b1_ref, w2_ref, b2_ref, w3_ref, b3_ref, o_ref):
    """Fused 3-layer MLP tile: (TB, D_in) -> (TB, D_out). All matmuls on MXU."""
    slope = jnp.float32(0.2)
    cdt = w1_ref.dtype  # compute dtype of MXU operands (bf16 default, or f32)

    h = jnp.dot(x_ref[...], w1_ref[...], preferred_element_type=jnp.float32)
    h = h + b1_ref[...]                    # (1, D_h) bias broadcasts over rows
    h = jnp.where(h > 0, h, slope * h)     # LeakyReLU(0.2)

    h = jnp.dot(h.astype(cdt), w2_ref[...], preferred_element_type=jnp.float32)
    h = h + b2_ref[...]
    h = jnp.where(h > 0, h, slope * h)

    y = jnp.dot(h.astype(cdt), w3_ref[...], preferred_element_type=jnp.float32)
    y = y + b3_ref[...]
    o_ref[...] = y.astype(o_ref.dtype)


# --------------------------------------------------------------------------- #
# Glue / wrapper
# --------------------------------------------------------------------------- #
_MIN_PALLAS_BATCH = 128  # below this the plain-jnp path wins (kernel overhead)


def _round_up(x, m):
    return ((x + m - 1) // m) * m


def _pick_tile(batch):
    """Batch tile: multiple of 128 (MXU M), capped at 1024 rows, and sized so the
    grid has >= 2 steps whenever the batch allows (feeds both v7x TensorCores)."""
    if batch < 256:
        return 128
    return min(1024, _round_up(pl.cdiv(batch, 2), 128))


def prepare_params(params, compute_dtype=jnp.bfloat16):
    """One-time weight prep (hoisted out of the forward path).

    Transposes PyTorch-convention (out, in) Linear weights to (in, out), reshapes
    biases to (1, out), and casts MXU operand weights to `compute_dtype` (bf16 by
    default; biases stay f32 since they are added post-MXU in f32).
    """
    return {
        "w1": jnp.asarray(params["w1"]).T.astype(compute_dtype),        # (D_in, D_h)
        "b1": jnp.asarray(params["b1"]).reshape(1, -1).astype(jnp.float32),
        "w2": jnp.asarray(params["w2"]).T.astype(compute_dtype),        # (D_h, D_h)
        "b2": jnp.asarray(params["b2"]).reshape(1, -1).astype(jnp.float32),
        "w3": jnp.asarray(params["w3"]).T.astype(compute_dtype),        # (D_h, D_out)
        "b3": jnp.asarray(params["b3"]).reshape(1, -1).astype(jnp.float32),
        "compute_dtype": compute_dtype,
    }


def shape_mapper_forward(id_feature, prepped, *, out_dtype=jnp.float32):
    """Pallas forward for ShapeMapper.

    id_feature: (B, D_in) array.
    prepped:    output of prepare_params() (weights already transposed / cast).
    out_dtype:  output dtype (f32 default to match the PyTorch module; pass
                jnp.bfloat16 to halve output write-back if the consumer tolerates it).
    Returns (B, D_out) in `out_dtype`.
    """
    B, D_in = id_feature.shape
    w1, b1 = prepped["w1"], prepped["b1"]
    w2, b2 = prepped["w2"], prepped["b2"]
    w3, b3 = prepped["w3"], prepped["b3"]
    cdt = prepped["compute_dtype"]
    D_h = w1.shape[1]
    d_out = w3.shape[1]

    x = id_feature.astype(cdt)

    if B < _MIN_PALLAS_BATCH:
        # Tiny batch: three D=128 matmuls are a few us; pallas_call setup and
        # per-step overhead dominate, and XLA fuses this MLP fine.
        h = jnp.dot(x, w1, preferred_element_type=jnp.float32) + b1
        h = jnp.where(h > 0, h, 0.2 * h)
        h = jnp.dot(h.astype(cdt), w2, preferred_element_type=jnp.float32) + b2
        h = jnp.where(h > 0, h, 0.2 * h)
        y = jnp.dot(h.astype(cdt), w3, preferred_element_type=jnp.float32) + b3
        return y.astype(out_dtype)

    tile = _pick_tile(B)
    grid = (pl.cdiv(B, tile),)  # ragged last block: Pallas masks its stores,
                                # no wrapper jnp.pad / output slice needed.

    bytes_accessed = (
        x.size * x.dtype.itemsize
        + sum(a.size * a.dtype.itemsize for a in (w1, b1, w2, b2, w3, b3))
        + B * d_out * jnp.dtype(out_dtype).itemsize
    )
    cost = pl.CostEstimate(
        flops=2 * B * (D_in * D_h + D_h * D_h + D_h * d_out),
        transcendentals=0,
        bytes_accessed=bytes_accessed,
    )

    in_specs = [
        pl.BlockSpec((tile, D_in), lambda i: (i, 0)),     # id_feature tile
        pl.BlockSpec((D_in, D_h), lambda i: (0, 0)),      # w1 (resident)
        pl.BlockSpec((1, D_h), lambda i: (0, 0)),         # b1
        pl.BlockSpec((D_h, D_h), lambda i: (0, 0)),       # w2
        pl.BlockSpec((1, D_h), lambda i: (0, 0)),         # b2
        pl.BlockSpec((D_h, d_out), lambda i: (0, 0)),     # w3
        pl.BlockSpec((1, d_out), lambda i: (0, 0)),       # b3
    ]
    out_spec = pl.BlockSpec((tile, d_out), lambda i: (i, 0))

    return pl.pallas_call(
        _mapper_kernel,
        out_shape=jax.ShapeDtypeStruct((B, d_out), out_dtype),
        grid_spec=pltpu.PrefetchScalarGridSpec(
            num_scalar_prefetch=0,
            grid=grid,
            in_specs=in_specs,
            out_specs=out_spec,
        ),
        compiler_params=pltpu.CompilerParams(
            dimension_semantics=("parallel",),   # batch tiles shard across TCs (v7x)
        ),
        cost_estimate=cost,
    )(x, w1, b1, w2, b2, w3, b3)


# --------------------------------------------------------------------------- #
# Synthetic weights + reference
# --------------------------------------------------------------------------- #
def init_params(key, d_in, d_h, d_out):
    """Deterministic synthetic weights (PyTorch Linear convention: (out, in))."""
    ks = jax.random.split(key, 6)
    s1 = 1.0 / jnp.sqrt(d_in)
    s2 = 1.0 / jnp.sqrt(d_h)
    return {
        "w1": jax.random.uniform(ks[0], (d_h, d_in), jnp.float32, -s1, s1),
        "b1": jax.random.uniform(ks[1], (d_h,), jnp.float32, -s1, s1),
        "w2": jax.random.uniform(ks[2], (d_h, d_h), jnp.float32, -s2, s2),
        "b2": jax.random.uniform(ks[3], (d_h,), jnp.float32, -s2, s2),
        "w3": jax.random.uniform(ks[4], (d_out, d_h), jnp.float32, -s2, s2),
        "b3": jax.random.uniform(ks[5], (d_out,), jnp.float32, -s2, s2),
    }


def _reference_forward(id_feature, params):
    """Plain-JAX reference matching PyTorch semantics (x @ W.T + b, LeakyReLU 0.2)."""
    h = id_feature @ params["w1"].T + params["b1"]
    h = jnp.where(h > 0, h, 0.2 * h)
    h = h @ params["w2"].T + params["b2"]
    h = jnp.where(h > 0, h, 0.2 * h)
    return h @ params["w3"].T + params["b3"]


# --------------------------------------------------------------------------- #
# Self-test
# --------------------------------------------------------------------------- #
if __name__ == "__main__":
    key = jax.random.PRNGKey(0)
    D_IN, D_H = 128, 128

    # Case 1: tiny batch -> plain-jnp fallback path (f32 compute, tight tolerance).
    B1, D_OUT1 = 8, 64
    k_x, k_p, key = jax.random.split(key, 3)
    x1 = jax.random.normal(k_x, (B1, D_IN), dtype=jnp.float32)
    p1 = init_params(k_p, D_IN, D_H, D_OUT1)
    out1 = jax.block_until_ready(
        shape_mapper_forward(x1, prepare_params(p1, compute_dtype=jnp.float32)))
    ref1 = _reference_forward(x1, p1)
    assert out1.shape == (B1, D_OUT1)
    assert jnp.allclose(out1, ref1, atol=1e-4, rtol=1e-4), "fallback mismatch"

    # Case 2: Pallas kernel, bf16 default compute, batch = 2 tiles of 128.
    B2, D_OUT2 = 256, 100
    k_x, k_p, key = jax.random.split(key, 3)
    x2 = jax.random.normal(k_x, (B2, D_IN), dtype=jnp.float32)
    p2 = init_params(k_p, D_IN, D_H, D_OUT2)
    out2 = jax.block_until_ready(shape_mapper_forward(x2, prepare_params(p2)))
    ref2 = _reference_forward(x2, p2)
    assert out2.shape == (B2, D_OUT2)
    assert jnp.allclose(out2, ref2, atol=5e-2, rtol=5e-2), "bf16 kernel mismatch"

    # Case 3: Pallas kernel, f32 compute, ragged last block (200 rows, tile 128).
    B3, D_OUT3 = 200, 100
    k_x, k_p, key = jax.random.split(key, 3)
    x3 = jax.random.normal(k_x, (B3, D_IN), dtype=jnp.float32)
    p3 = init_params(k_p, D_IN, D_H, D_OUT3)
    out3 = jax.block_until_ready(
        shape_mapper_forward(x3, prepare_params(p3, compute_dtype=jnp.float32)))
    ref3 = _reference_forward(x3, p3)
    assert out3.shape == (B3, D_OUT3)
    assert jnp.allclose(out3, ref3, atol=1e-4, rtol=1e-4), "ragged-block mismatch"

    # Case 4: larger batch -> bigger tile (384), 2 parallel grid steps, bf16.
    B4, D_OUT4 = 600, 100
    k_x, k_p, key = jax.random.split(key, 3)
    x4 = jax.random.normal(k_x, (B4, D_IN), dtype=jnp.float32)
    p4 = init_params(k_p, D_IN, D_H, D_OUT4)
    out4 = jax.block_until_ready(shape_mapper_forward(x4, prepare_params(p4)))
    ref4 = _reference_forward(x4, p4)
    assert out4.shape == (B4, D_OUT4)
    assert jnp.allclose(out4, ref4, atol=5e-2, rtol=5e-2), "large-tile mismatch"

    print("KERNEL_OK")
</pallas_src>

<mosaic_0001>
module attributes {stable_mosaic.version = 11 : i64} {
  func.func @_mapper_kernel(%arg0: i32, %arg1: memref<128x128xbf16, #tpu.memory_space<vmem>>, %arg2: memref<128x128xbf16, #tpu.memory_space<vmem>>, %arg3: memref<1x128xf32, #tpu.memory_space<vmem>>, %arg4: memref<128x128xbf16, #tpu.memory_space<vmem>>, %arg5: memref<1x128xf32, #tpu.memory_space<vmem>>, %arg6: memref<128x100xbf16, #tpu.memory_space<vmem>>, %arg7: memref<1x100xf32, #tpu.memory_space<vmem>>, %arg8: memref<128x100xf32, #tpu.memory_space<vmem>>) attributes {dimension_semantics = [#tpu.dimension_semantics<parallel>], iteration_bounds = array<i64: 2>, scalar_prefetch = 0 : i64, scratch_operands = 0 : i64, tpu.core_type = #tpu.core_type<tc>, window_params = [{transform_indices = @transform_0, window_bounds = array<i64: 128, 128>}, {pipeline_mode = #tpu.pipeline_mode<synchronous>, transform_indices = @transform_1, window_bounds = array<i64: 128, 128>}, {pipeline_mode = #tpu.pipeline_mode<synchronous>, transform_indices = @transform_2, window_bounds = array<i64: 1, 128>}, {pipeline_mode = #tpu.pipeline_mode<synchronous>, transform_indices = @transform_3, window_bounds = array<i64: 128, 128>}, {pipeline_mode = #tpu.pipeline_mode<synchronous>, transform_indices = @transform_4, window_bounds = array<i64: 1, 128>}, {pipeline_mode = #tpu.pipeline_mode<synchronous>, transform_indices = @transform_5, window_bounds = array<i64: 128, 100>}, {pipeline_mode = #tpu.pipeline_mode<synchronous>, transform_indices = @transform_6, window_bounds = array<i64: 1, 100>}, {transform_indices = @transform_7, window_bounds = array<i64: 128, 100>}]} {
    %c0 = arith.constant 0 : index
    %c0_0 = arith.constant 0 : index
    %0 = vector.load %arg1[%c0, %c0_0] : memref<128x128xbf16, #tpu.memory_space<vmem>>, vector<128x128xbf16>
    %c0_1 = arith.constant 0 : index
    %c0_2 = arith.constant 0 : index
    %1 = vector.load %arg2[%c0_1, %c0_2] : memref<128x128xbf16, #tpu.memory_space<vmem>>, vector<128x128xbf16>
    %cst = arith.constant dense<0.000000e+00> : vector<128x128xf32>
    %2 = tpu.matmul %0, %1, %cst {dimension_numbers = #tpu.dot_dimension_numbers<[1], [0], [0], [1], [0, 0, 1, 1], [], []>} : vector<128x128xbf16>, vector<128x128xbf16>, vector<128x128xf32> -> vector<128x128xf32>
    %c0_3 = arith.constant 0 : index
    %c0_4 = arith.constant 0 : index
    %3 = vector.load %arg3[%c0_3, %c0_4] : memref<1x128xf32, #tpu.memory_space<vmem>>, vector<1x128xf32>
    %4 = vector.broadcast %3 : vector<1x128xf32> to vector<128x128xf32>
    %5 = arith.addf %2, %4 : vector<128x128xf32>
    %cst_5 = arith.constant 0.000000e+00 : f32
    %6 = vector.broadcast %cst_5 : f32 to vector<128x128xf32>
    %7 = arith.cmpf ogt, %5, %6 : vector<128x128xf32>
    %cst_6 = arith.constant 2.000000e-01 : f32
    %8 = vector.broadcast %cst_6 : f32 to vector<128x128xf32>
    %9 = arith.mulf %8, %5 : vector<128x128xf32>
    %10 = arith.select %7, %5, %9 : vector<128x128xi1>, vector<128x128xf32>
    %11 = arith.truncf %10 : vector<128x128xf32> to vector<128x128xbf16>
    %c0_7 = arith.constant 0 : index
    %c0_8 = arith.constant 0 : index
    %12 = vector.load %arg4[%c0_7, %c0_8] : memref<128x128xbf16, #tpu.memory_space<vmem>>, vector<128x128xbf16>
    %cst_9 = arith.constant dense<0.000000e+00> : vector<128x128xf32>
    %13 = tpu.matmul %11, %12, %cst_9 {dimension_numbers = #tpu.dot_dimension_numbers<[1], [0], [0], [1], [0, 0, 1, 1], [], []>} : vector<128x128xbf16>, vector<128x128xbf16>, vector<128x128xf32> -> vector<128x128xf32>
    %c0_10 = arith.constant 0 : index
    %c0_11 = arith.constant 0 : index
    %14 = vector.load %arg5[%c0_10, %c0_11] : memref<1x128xf32, #tpu.memory_space<vmem>>, vector<1x128xf32>
    %15 = vector.broadcast %14 : vector<1x128xf32> to vector<128x128xf32>
    %16 = arith.addf %13, %15 : vector<128x128xf32>
    %cst_12 = arith.constant 0.000000e+00 : f32
    %17 = vector.broadcast %cst_12 : f32 to vector<128x128xf32>
    %18 = arith.cmpf ogt, %16, %17 : vector<128x128xf32>
    %cst_13 = arith.constant 2.000000e-01 : f32
    %19 = vector.broadcast %cst_13 : f32 to vector<128x128xf32>
    %20 = arith.mulf %19, %16 : vector<128x128xf32>
    %21 = arith.select %18, %16, %20 : vector<128x128xi1>, vector<128x128xf32>
    %22 = arith.truncf %21 : vector<128x128xf32> to vector<128x128xbf16>
    %c0_14 = arith.constant 0 : index
    %c0_15 = arith.constant 0 : index
    %23 = vector.load %arg6[%c0_14, %c0_15] : memref<128x100xbf16, #tpu.memory_space<vmem>>, vector<128x100xbf16>
    %cst_16 = arith.constant dense<0.000000e+00> : vector<128x100xf32>
    %24 = tpu.matmul %22, %23, %cst_16 {dimension_numbers = #tpu.dot_dimension_numbers<[1], [0], [0], [1], [0, 0, 1, 1], [], []>} : vector<128x128xbf16>, vector<128x100xbf16>, vector<128x100xf32> -> vector<128x100xf32>
    %c0_17 = arith.constant 0 : index
    %c0_18 = arith.constant 0 : index
    %25 = vector.load %arg7[%c0_17, %c0_18] : memref<1x100xf32, #tpu.memory_space<vmem>>, vector<1x100xf32>
    %26 = vector.broadcast %25 : vector<1x100xf32> to vector<128x100xf32>
    %27 = arith.addf %24, %26 : vector<128x100xf32>
    %c0_19 = arith.constant 0 : index
    %c0_20 = arith.constant 0 : index
    %28 = vector.load %arg8[%c0_19, %c0_20] : memref<128x100xf32, #tpu.memory_space<vmem>>, vector<128x100xf32>
    tpu.vector_store %arg8[%c0_19, %c0_20], %27 {strides = array<i32>} : memref<128x100xf32, #tpu.memory_space<vmem>>, vector<128x100xf32>,
    return
  }
  func.func @transform_0(%arg0: i32) -> (i32, i32) {
    %c0_i32 = arith.constant 0 : i32
    %c0_i32_0 = arith.constant 0 : i32
    return %arg0, %c0_i32 : i32, i32
  }
  func.func @transform_1(%arg0: i32) -> (i32, i32) {
    %c0_i32 = arith.constant 0 : i32
    %c0_i32_0 = arith.constant 0 : i32
    %c0_i32_1 = arith.constant 0 : i32
    return %c0_i32, %c0_i32_0 : i32, i32
  }
  func.func @transform_2(%arg0: i32) -> (i32, i32) {
    %c0_i32 = arith.constant 0 : i32
    %c0_i32_0 = arith.constant 0 : i32
    %c0_i32_1 = arith.constant 0 : i32
    return %c0_i32, %c0_i32_0 : i32, i32
  }
  func.func @transform_3(%arg0: i32) -> (i32, i32) {
    %c0_i32 = arith.constant 0 : i32
    %c0_i32_0 = arith.constant 0 : i32
    %c0_i32_1 = arith.constant 0 : i32
    return %c0_i32, %c0_i32_0 : i32, i32
  }
  func.func @transform_4(%arg0: i32) -> (i32, i32) {
    %c0_i32 = arith.constant 0 : i32
    %c0_i32_0 = arith.constant 0 : i32
    %c0_i32_1 = arith.constant 0 : i32
    return %c0_i32, %c0_i32_0 : i32, i32
  }
  func.func @transform_5(%arg0: i32) -> (i32, i32) {
    %c0_i32 = arith.constant 0 : i32
    %c0_i32_0 = arith.constant 0 : i32
    %c0_i32_1 = arith.constant 0 : i32
    return %c0_i32, %c0_i32_0 : i32, i32
  }
  func.func @transform_6(%arg0: i32) -> (i32, i32) {
    %c0_i32 = arith.constant 0 : i32
    %c0_i32_0 = arith.constant 0 : i32
    %c0_i32_1 = arith.constant 0 : i32
    return %c0_i32, %c0_i32_0 : i32, i32
  }
  func.func @transform_7(%arg0: i32) -> (i32, i32) {
    %c0_i32 = arith.constant 0 : i32
    %c0_i32_0 = arith.constant 0 : i32
    return %arg0, %c0_i32 : i32, i32
  }
}

</mosaic_0001>

<llo_original>
// kernel: tpu_custom_call.1
$region0: #{tpu_custom_call.1}
  #allocation0 [shape = 'u32[]', space=smem, size = 0x4, offset = 0x4, fixed_abs, tag = 'smem constant byte address 0x4 - core index']
  #allocation1 [shape = 'u32[144,128]{1,0:T(1,128)}', space=vmem, size = 0x12000, scoped, tag = 'internal scratch']
  %s0 = inlined_call_operand.hbm [shape: bf16[256,128], index: 0, kind: input, shape index: {}]
  %s1 = inlined_call_operand.vmem [shape: bf16[128,128], index: 1, kind: input, shape index: {}]
  %s2 = inlined_call_operand.vmem [shape: f32[1,128], index: 2, kind: input, shape index: {}]
  %s3 = inlined_call_operand.hbm [shape: bf16[128,128], index: 3, kind: input, shape index: {}]
  %s4 = inlined_call_operand.vmem [shape: f32[1,128], index: 4, kind: input, shape index: {}]
  %s5 = inlined_call_operand.vmem [shape: bf16[128,100], index: 5, kind: input, shape index: {}]
  %s6 = inlined_call_operand.vmem [shape: f32[1,100], index: 6, kind: input, shape index: {}]
  %s7 = inlined_call_operand.vmem [shape: f32[256,100], index: 7, kind: output, shape index: {}]
  %s8 = sld [smem:[#allocation0]]
  $region69: #{tpu_custom_call.1} parent=0
    _
  %s10 = ssub.s32 1, %s8
  %s11 = scalar_select 0, %s10, %s8
  $region1: #{tpu_custom_call.1} parent=0
    #allocation2 [shape = 'u8[65536]{0}', space=vmem, size = 0x10000, scoped, tag = 'input window, operand 0']
    #allocation3 [shape = 's32[2]{0}', space=sflag, size = 0x8, scoped, tag = 'scoped memory for tpu_custom_call.1']
    #allocation4 [shape = 'u8[32768]{0}', space=vmem, size = 0x8000, scoped, tag = 'input window, operand 3, single buffered']
    #allocation5 [shape = 's32[1]{0}', space=sflag, size = 0x4, scoped, tag = 'scoped memory for tpu_custom_call.1']
    %12 = vsyncpa [#allocation3], 0
    %s13 = scalar_lea.sflag [#allocation3], 1
    %14 = vsyncpa %s13, 0
    %15 = vsyncpa [#allocation5], 0
    loop: start=0, step=1, limit=4
    $region2: #{tpu_custom_call.1} parent=1 // loop_pre_header
      _
    $region3: #{tpu_custom_call.1} parent=1 // loop_header
      %s17 = sphi 0, %s21
      %p18 = scmp.ge.s32.totalorder %s17, 4
      %s27 = sphi 0, %s29
      %s30 = sphi 0, %s27
      %s31 = sphi 0, %s30
      %s47 = sphi 0, %s31
      %s51 = sphi 0, %s51
      %s53 = sphi 0, %s51
      %s54 = sphi 0, %s53
      %s68 = sphi 0, %s54
      %s72 = sphi 0, %s72
      %s74 = sphi 0, %s72
      %s75 = sphi 0, %s74
      %s89 = sphi 0, %s75
      %s93 = sphi 0, %s93
      %s95 = sphi 0, %s93
      %s96 = sphi 0, %s95
      %s110 = sphi 0, %s96
      %s114 = sphi 0, %s114
      %s116 = sphi 0, %s114
      %s117 = sphi 0, %s116
      %s131 = sphi 0, %s117
      %s135 = sphi 0, %s135
      %s137 = sphi 0, %s135
      %s138 = sphi 0, %s137
      %s152 = sphi 0, %s138
      %s156 = sphi 0, %s156
      %s158 = sphi 0, %s156
      %s159 = sphi 0, %s158
      %s173 = sphi 0, %s159
      %s179 = sphi 0, %s181
      %s182 = sphi 0, %s179
      %s183 = sphi 0, %s182
      %s199 = sphi 0, %s183
    $region4: #{tpu_custom_call.1} parent=1 // loop_header_branch
      %20 = sbr.rel (%p18) target = $region8
    $region5: #{tpu_custom_call.1} parent=1 // loop_body
      %s22 = ssub.s32 %s17, 1
      %s23 = ssub.s32 %s17, 2
      %s24 = sadd.s32 %s17, 1
      %s25 = ssub.s32 %s17, %s24
      %p26 = scmp.eq.s32.totalorder %s25, 0
      %s28 = sadd.s32 %s27, 1
      %s29 = scalar_select %p26, %s27, %s28
      %p32 = pneg %p26
      %p33 = scmp.eq.s32.totalorder %s17, 1
      %p34 = por %p32, %p33
      %p35 = scmp.ne.s32.totalorder %s27, %s30
      %p36 = scmp.eq.s32.totalorder %s17, 0
      %p37 = por %p35, %p36
      %p38 = scmp.ne.s32.totalorder %s27, %s30
      %p39 = scmp.eq.s32.totalorder %s22, 1
      %p40 = por %p38, %p39
      %p41 = scmp.ne.s32.totalorder %s30, %s31
      %p42 = scmp.eq.s32.totalorder %s22, 0
      %p43 = por %p41, %p42
      %p44 = scmp.ne.s32.totalorder %s30, %s31
      %p45 = scmp.eq.s32.totalorder %s23, 1
      %p46 = por %p44, %p45
      %p48 = scmp.ne.s32.totalorder %s31, %s47
      %p49 = scmp.eq.s32.totalorder %s23, 0
      %p50 = por %p48, %p49
      %s52 = sadd.s32 %s51, 1
      %p55 = scmp.eq.s32.totalorder %s17, 1
      %p56 = scmp.ne.s32.totalorder %s51, %s53
      %p57 = scmp.eq.s32.totalorder %s17, 0
      %p58 = por %p56, %p57
      %p59 = scmp.ne.s32.totalorder %s51, %s53
      %p60 = scmp.eq.s32.totalorder %s22, 1
      %p61 = por %p59, %p60
      %p62 = scmp.ne.s32.totalorder %s53, %s54
      %p63 = scmp.eq.s32.totalorder %s22, 0
      %p64 = por %p62, %p63
      %p65 = scmp.ne.s32.totalorder %s53, %s54
      %p66 = scmp.eq.s32.totalorder %s23, 1
      %p67 = por %p65, %p66
      %p69 = scmp.ne.s32.totalorder %s54, %s68
      %p70 = scmp.eq.s32.totalorder %s23, 0
      %p71 = por %p69, %p70
      %s73 = sadd.s32 %s72, 1
      %p76 = scmp.eq.s32.totalorder %s17, 1
      %p77 = scmp.ne.s32.totalorder %s72, %s74
      %p78 = scmp.eq.s32.totalorder %s17, 0
      %p79 = por %p77, %p78
      %p80 = scmp.ne.s32.totalorder %s72, %s74
      %p81 = scmp.eq.s32.totalorder %s22, 1
      %p82 = por %p80, %p81
      %p83 = scmp.ne.s32.totalorder %s74, %s75
      %p84 = scmp.eq.s32.totalorder %s22, 0
      %p85 = por %p83, %p84
      %p86 = scmp.ne.s32.totalorder %s74, %s75
      %p87 = scmp.eq.s32.totalorder %s23, 1
      %p88 = por %p86, %p87
      %p90 = scmp.ne.s32.totalorder %s75, %s89
      %p91 = scmp.eq.s32.totalorder %s23, 0
      %p92 = por %p90, %p91
      %s94 = sadd.s32 %s93, 1
      %p97 = scmp.eq.s32.totalorder %s17, 1
      %p98 = scmp.ne.s32.totalorder %s93, %s95
      %p99 = scmp.eq.s32.totalorder %s17, 0
      %p100 = por %p98, %p99
      %p101 = scmp.ne.s32.totalorder %s93, %s95
      %p102 = scmp.eq.s32.totalorder %s22, 1
      %p103 = por %p101, %p102
      %p104 = scmp.ne.s32.totalorder %s95, %s96
      %p105 = scmp.eq.s32.totalorder %s22, 0
      %p106 = por %p104, %p105
      %p107 = scmp.ne.s32.totalorder %s95, %s96
      %p108 = scmp.eq.s32.totalorder %s23, 1
      %p109 = por %p107, %p108
      %p111 = scmp.ne.s32.totalorder %s96, %s110
      %p112 = scmp.eq.s32.totalorder %s23, 0
      %p113 = por %p111, %p112
      %s115 = sadd.s32 %s114, 1
      %p118 = scmp.eq.s32.totalorder %s17, 1
      %p119 = scmp.ne.s32.totalorder %s114, %s116
      %p120 = scmp.eq.s32.totalorder %s17, 0
      %p121 = por %p119, %p120
      %p122 = scmp.ne.s32.totalorder %s114, %s116
      %p123 = scmp.eq.s32.totalorder %s22, 1
      %p124 = por %p122, %p123
      %p125 = scmp.ne.s32.totalorder %s116, %s117
      %p126 = scmp.eq.s32.totalorder %s22, 0
      %p127 = por %p125, %p126
      %p128 = scmp.ne.s32.totalorder %s116, %s117
      %p129 = scmp.eq.s32.totalorder %s23, 1
      %p130 = por %p128, %p129
      %p132 = scmp.ne.s32.totalorder %s117, %s131
      %p133 = scmp.eq.s32.totalorder %s23, 0
      %p134 = por %p132, %p133
      %s136 = sadd.s32 %s135, 1
      %p139 = scmp.eq.s32.totalorder %s17, 1
      %p140 = scmp.ne.s32.totalorder %s135, %s137
      %p141 = scmp.eq.s32.totalorder %s17, 0
      %p142 = por %p140, %p141
      %p143 = scmp.ne.s32.totalorder %s135, %s137
      %p144 = scmp.eq.s32.totalorder %s22, 1
      %p145 = por %p143, %p144
      %p146 = scmp.ne.s32.totalorder %s137, %s138
      %p147 = scmp.eq.s32.totalorder %s22, 0
      %p148 = por %p146, %p147
      %p149 = scmp.ne.s32.totalorder %s137, %s138
      %p150 = scmp.eq.s32.totalorder %s23, 1
      %p151 = por %p149, %p150
      %p153 = scmp.ne.s32.totalorder %s138, %s152
      %p154 = scmp.eq.s32.totalorder %s23, 0
      %p155 = por %p153, %p154
      %s157 = sadd.s32 %s156, 1
      %p160 = scmp.eq.s32.totalorder %s17, 1
      %p161 = scmp.ne.s32.totalorder %s156, %s158
      %p162 = scmp.eq.s32.totalorder %s17, 0
      %p163 = por %p161, %p162
      %p164 = scmp.ne.s32.totalorder %s156, %s158
      %p165 = scmp.eq.s32.totalorder %s22, 1
      %p166 = por %p164, %p165
      %p167 = scmp.ne.s32.totalorder %s158, %s159
      %p168 = scmp.eq.s32.totalorder %s22, 0
      %p169 = por %p167, %p168
      %p170 = scmp.ne.s32.totalorder %s158, %s159
      %p171 = scmp.eq.s32.totalorder %s23, 1
      %p172 = por %p170, %p171
      %p174 = scmp.ne.s32.totalorder %s159, %s173
      %p175 = scmp.eq.s32.totalorder %s23, 0
      %p176 = por %p174, %p175
      %s177 = ssub.s32 %s17, %s24
      %p178 = scmp.eq.s32.totalorder %s177, 0
      %s180 = sadd.s32 %s179, 1
      %s181 = scalar_select %p178, %s179, %s180
      %p184 = pneg %p178
      %p185 = scmp.eq.s32.totalorder %s17, 1
      %p186 = por %p184, %p185
      %p187 = scmp.ne.s32.totalorder %s179, %s182
      %p188 = scmp.eq.s32.totalorder %s17, 0
      %p189 = por %p187, %p188
      %p190 = scmp.ne.s32.totalorder %s179, %s182
      %p191 = scmp.eq.s32.totalorder %s22, 1
      %p192 = por %p190, %p191
      %p193 = scmp.ne.s32.totalorder %s182, %s183
      %p194 = scmp.eq.s32.totalorder %s22, 0
      %p195 = por %p193, %p194
      %p196 = scmp.ne.s32.totalorder %s182, %s183
      %p197 = scmp.eq.s32.totalorder %s23, 1
      %p198 = por %p196, %p197
      %p200 = scmp.ne.s32.totalorder %s183, %s199
      %p201 = scmp.eq.s32.totalorder %s23, 0
      %p202 = por %p200, %p201
      %p203 = scmp.le.s32.totalorder 1, %s17
      %p204 = scmp.lt.s32.totalorder %s17, 3
      %p205 = pnand %p203, %p204
      %p206 = pneg %p205
      // Predicated region
      $region9: #{tpu_custom_call.1} parent=5 // pred_check
        _
      $region10: #{tpu_custom_call.1} parent=5 // pred_check_branch
        %208 = sbr.rel (%p205) target = $region12
      $region11: #{tpu_custom_call.1} parent=5 // pred_region
        %s209 = ssub.s32 %s17, 1
        // Predicated region
        $region13: #{tpu_custom_call.1} parent=11 // pred_check
          %p210 = pneg %p64
        $region14: #{tpu_custom_call.1} parent=11 // pred_check_branch
          %212 = sbr.rel (%p210) target = $region16
        $region15: #{tpu_custom_call.1} parent=11 // pred_region
          _
        $region16: #{tpu_custom_call.1} parent=11 // pred_fallthru
          _
        // Predicated region
        $region17: #{tpu_custom_call.1} parent=11 // pred_check
          %p213 = pneg %p85
        $region18: #{tpu_custom_call.1} parent=11 // pred_check_branch
          %215 = sbr.rel (%p213) target = $region20
        $region19: #{tpu_custom_call.1} parent=11 // pred_region
          _
        $region20: #{tpu_custom_call.1} parent=11 // pred_fallthru
          _
        // Predicated region
        $region21: #{tpu_custom_call.1} parent=11 // pred_check
          %p216 = pneg %p106
        $region22: #{tpu_custom_call.1} parent=11 // pred_check_branch
          %218 = sbr.rel (%p216) target = $region24
        $region23: #{tpu_custom_call.1} parent=11 // pred_region
          %s220 = ssub.s32 1024, 1024
          %221 = vsyncadd [#allocation5], %s220
          %s222 = sshll.u32 [#allocation4], 4
          %s223 = int_to_ptr.vmem [resolvable:$true] %s222
          %228 = dma.hbm_to_vmem [thread:$0]  %s3, 1024, %s223, [#allocation5], 64, 64, 4
        $region24: #{tpu_custom_call.1} parent=11 // pred_fallthru
          _
        // Predicated region
        $region25: #{tpu_custom_call.1} parent=11 // pred_check
          %p229 = pneg %p127
        $region26: #{tpu_custom_call.1} parent=11 // pred_check_branch
          %231 = sbr.rel (%p229) target = $region28
        $region27: #{tpu_custom_call.1} parent=11 // pred_region
          _
        $region28: #{tpu_custom_call.1} parent=11 // pred_fallthru
          _
        // Predicated region
        $region29: #{tpu_custom_call.1} parent=11 // pred_check
          %p232 = pneg %p148
        $region30: #{tpu_custom_call.1} parent=11 // pred_check_branch
          %234 = sbr.rel (%p232) target = $region32
        $region31: #{tpu_custom_call.1} parent=11 // pred_region
          _
        $region32: #{tpu_custom_call.1} parent=11 // pred_fallthru
          _
        // Predicated region
        $region33: #{tpu_custom_call.1} parent=11 // pred_check
          %p235 = pneg %p169
        $region34: #{tpu_custom_call.1} parent=11 // pred_check_branch
          %237 = sbr.rel (%p235) target = $region36
        $region35: #{tpu_custom_call.1} parent=11 // pred_region
          _
        $region36: #{tpu_custom_call.1} parent=11 // pred_fallthru
          _
      $region12: #{tpu_custom_call.1} parent=5 // pred_fallthru
        _
      %p238 = scmp.lt.s32.totalorder %s17, 2
      // Predicated region
      $region37: #{tpu_custom_call.1} parent=5 // pred_check
        %p239 = pneg %p238
      $region38: #{tpu_custom_call.1} parent=5 // pred_check_branch
        %241 = sbr.rel (%p239) target = $region40
      $region39: #{tpu_custom_call.1} parent=5 // pred_region
        // Predicated region
        $region41: #{tpu_custom_call.1} parent=39 // pred_check
          %p242 = pneg %p37
        $region42: #{tpu_custom_call.1} parent=39 // pred_check_branch
          %244 = sbr.rel (%p242) target = $region44
        $region43: #{tpu_custom_call.1} parent=39 // pred_region
          %s245 = sand.u32 %s27, 1
          %s246 = scalar_lea.sflag [#allocation3], %s245
          %s247 = sand.u32 %s27, 1
          %s248 = smul.addr %s247, 64
          %s249 = scalar_lea.vmem [#allocation2], %s248
          %s250 = smul.u32 16, %s17
          %s252 = ssub.s32 1024, 1024
          %253 = vsyncadd %s246, %s252
          %s254 = smul.addr %s250, 64
          %s255 = scalar_lea.hbm %s0, %s254
          %s256 = sshll.u32 %s249, 4
          %s257 = int_to_ptr.vmem [resolvable:$true] %s256
          %262 = dma.hbm_to_vmem [thread:$0]  %s255, 1024, %s257, %s246, 64, 64, 4
        $region44: #{tpu_custom_call.1} parent=39 // pred_fallthru
          _
      $region40: #{tpu_custom_call.1} parent=5 // pred_fallthru
        _
      %p263 = scmp.le.s32.totalorder 1, %s17
      %p264 = scmp.lt.s32.totalorder %s17, 3
      %p265 = pnand %p263, %p264
      %p266 = pneg %p265
      // Predicated region
      $region45: #{tpu_custom_call.1} parent=5 // pred_check
        _
      $region46: #{tpu_custom_call.1} parent=5 // pred_check_branch
        %268 = sbr.rel (%p265) target = $region48
      $region47: #{tpu_custom_call.1} parent=5 // pred_region
        %s269 = ssub.s32 %s17, 1
        %s270 = sand.u32 %s30, 1
        %s271 = scalar_lea.sflag [#allocation3], %s270
        %s272 = sand.u32 %s30, 1
        %s273 = smul.addr %s272, 64
        %s274 = scalar_lea.vmem [#allocation2], %s273
        // Predicated region
        $region49: #{tpu_custom_call.1} parent=47 // pred_check
          %p275 = pneg %p43
        $region50: #{tpu_custom_call.1} parent=47 // pred_check_branch
          %277 = sbr.rel (%p275) target = $region52
        $region51: #{tpu_custom_call.1} parent=47 // pred_region
          %278 = dma.done %s271, 1024
        $region52: #{tpu_custom_call.1} parent=47 // pred_fallthru
          _
        // Predicated region
        $region53: #{tpu_custom_call.1} parent=47 // pred_check
          %p279 = pneg %p106
        $region54: #{tpu_custom_call.1} parent=47 // pred_check_branch
          %281 = sbr.rel (%p279) target = $region56
        $region55: #{tpu_custom_call.1} parent=47 // pred_region
          %282 = dma.done [#allocation5], 1024
        $region56: #{tpu_custom_call.1} parent=47 // pred_fallthru
          _
        %s283 = sand.u32 %s30, 1
        %s284 = scalar_lea.sflag [#allocation3], %s283
        %s285 = sand.u32 %s30, 1
        %s286 = smul.addr %s285, 64
        %s287 = scalar_lea.vmem [#allocation2], %s286
        %p288 = pneg %p43
        %p289 = pneg %p40
        %p290 = pneg %p64
        %p291 = pneg %p61
        %p292 = pneg %p85
        %p293 = pneg %p82
        %p294 = pneg %p106
        %p295 = pneg %p103
        %p296 = pneg %p127
        %p297 = pneg %p124
        %p298 = pneg %p148
        %p299 = pneg %p145
        %p300 = pneg %p169
        %p301 = pneg %p166
        %p302 = pneg %p195
        %p303 = pneg %p192
        %s304 = smul.u32 16, %s22
        %p305 = scmp.lt.s32.totalorder %s304, 31
        %s306 = scalar_select %p305, %s304, 31
        %s307 = smul.addr %s306, 8
        %s308 = scalar_lea.vmem %s7, %s307
        %s309 = smul.u32 16, %s22
        %s310 = smul.u32 16, %s22
        %p311 = scmp.lt.s32.totalorder %s310, 31
        %s312 = scalar_select %p311, %s310, 31
        %s313 = smul.addr %s312, 8
        %s314 = scalar_lea.vmem %s7, %s313
        %s315 = smul.u32 16, %s22
        %v317 = vld [vmem:[%s274] sm:$0xf]
        %v318 = vld [vmem:[%s274 + $0x4] sm:$0xf]
        %v319 = vld [vmem:[%s274 + $0x8] sm:$0xf]
        %v320 = vld [vmem:[%s274 + $0xc] sm:$0xf]
        %v321 = vld [vmem:[%s274 + $0x10] sm:$0xf]
        %v322 = vld [vmem:[%s274 + $0x14] sm:$0xf]
        %v323 = vld [vmem:[%s274 + $0x18] sm:$0xf]
        %v324 = vld [vmem:[%s274 + $0x1c] sm:$0xf]
        %v325 = vld [vmem:[%s274 + $0x20] sm:$0xf]
        %v326 = vld [vmem:[%s274 + $0x24] sm:$0xf]
        %v327 = vld [vmem:[%s274 + $0x28] sm:$0xf]
        %v328 = vld [vmem:[%s274 + $0x2c] sm:$0xf]
        %v329 = vld [vmem:[%s274 + $0x30] sm:$0xf]
        %v330 = vld [vmem:[%s274 + $0x34] sm:$0xf]
        %v331 = vld [vmem:[%s274 + $0x38] sm:$0xf]
        %v332 = vld [vmem:[%s274 + $0x3c] sm:$0xf]
        %v333 = vld [vmem:[%s1] sm:$0xf]
        %v334 = vld [vmem:[%s1 + $0x4] sm:$0xf]
        %v335 = vld [vmem:[%s1 + $0x8] sm:$0xf]
        %v336 = vld [vmem:[%s1 + $0xc] sm:$0xf]
        %v337 = vld [vmem:[%s1 + $0x10] sm:$0xf]
        %v338 = vld [vmem:[%s1 + $0x14] sm:$0xf]
        %v339 = vld [vmem:[%s1 + $0x18] sm:$0xf]
        %v340 = vld [vmem:[%s1 + $0x1c] sm:$0xf]
        %v341 = vld [vmem:[%s1 + $0x20] sm:$0xf]
        %v342 = vld [vmem:[%s1 + $0x24] sm:$0xf]
        %v343 = vld [vmem:[%s1 + $0x28] sm:$0xf]
        %v344 = vld [vmem:[%s1 + $0x2c] sm:$0xf]
        %v345 = vld [vmem:[%s1 + $0x30] sm:$0xf]
        %v346 = vld [vmem:[%s1 + $0x34] sm:$0xf]
        %v347 = vld [vmem:[%s1 + $0x38] sm:$0xf]
        %v348 = vld [vmem:[%s1 + $0x3c] sm:$0xf]
        %v349 = vld [vmem:[%s2] sm:$0x1]
        %v351 = vlaneseq
        %v352 = vshrl.u32 %v351, 7
        %v353 = vsub.s32 0, %v352
        %v354 = vrot.slane %v349, %v353
        %v372 = vunpack.c.l.b16 %v317
        %v373 = vunpack.c.l.b16 %v318
        %v374 = vunpack.c.l.b16 %v319
        %v375 = vunpack.c.l.b16 %v320
        %v376 = vunpack.c.l.b16 %v321
        %v377 = vunpack.c.l.b16 %v322
        %v378 = vunpack.c.l.b16 %v323
        %v379 = vunpack.c.l.b16 %v324
        %v380 = vunpack.c.l.b16 %v325
        %v381 = vunpack.c.l.b16 %v326
        %v382 = vunpack.c.l.b16 %v327
        %v383 = vunpack.c.l.b16 %v328
        %v384 = vunpack.c.l.b16 %v329
        %v385 = vunpack.c.l.b16 %v330
        %v386 = vunpack.c.l.b16 %v331
        %v387 = vunpack.c.l.b16 %v332
        %v388 = vpack.c.b16 %v373, %v372
        %v389 = vpack.c.b16 %v375, %v374
        %v390 = vpack.c.b16 %v377, %v376
        %v391 = vpack.c.b16 %v379, %v378
        %v392 = vpack.c.b16 %v381, %v380
        %v393 = vpack.c.b16 %v383, %v382
        %v394 = vpack.c.b16 %v385, %v384
        %v395 = vpack.c.b16 %v387, %v386
        %v420 = vunpack.c.l.b16 %v333
        %v421 = vunpack.c.l.b16 %v334
        %v422 = vunpack.c.l.b16 %v335
        %v423 = vunpack.c.l.b16 %v336
        %v424 = vunpack.c.l.b16 %v337
        %v425 = vunpack.c.l.b16 %v338
        %v426 = vunpack.c.l.b16 %v339
        %v427 = vunpack.c.l.b16 %v340
        %v428 = vunpack.c.l.b16 %v341
        %v429 = vunpack.c.l.b16 %v342
        %v430 = vunpack.c.l.b16 %v343
        %v431 = vunpack.c.l.b16 %v344
        %v432 = vunpack.c.l.b16 %v345
        %v433 = vunpack.c.l.b16 %v346
        %v434 = vunpack.c.l.b16 %v347
        %v435 = vunpack.c.l.b16 %v348
        %v436 = vpack.c.b16 %v421, %v420
        %v437 = vpack.c.b16 %v423, %v422
        %v438 = vpack.c.b16 %v425, %v424
        %v439 = vpack.c.b16 %v427, %v426
        %v440 = vpack.c.b16 %v429, %v428
        %v441 = vpack.c.b16 %v431, %v430
        %v442 = vpack.c.b16 %v433, %v432
        %v443 = vpack.c.b16 %v435, %v434
        %452 = vmatprep.subr.bf16.mxu0 0
        %453 = vmatpush1.bf16.msra.mxu0 %v436
        %454 = vmatprep.subr.bf16.mxu0 0
        %455 = vmatpush1.bf16.msra.mxu0 %v437
        %456 = vmatprep.subr.bf16.mxu0 0
        %457 = vmatpush1.bf16.msra.mxu0 %v438
        %458 = vmatprep.subr.bf16.mxu0 0
        %459 = vmatpush1.bf16.msra.mxu0 %v439
        %460 = vmatprep.subr.bf16.mxu0 0
        %461 = vmatpush1.bf16.msra.mxu0 %v440
        %462 = vmatprep.subr.bf16.mxu0 0
        %463 = vmatpush1.bf16.msra.mxu0 %v441
        %464 = vmatprep.subr.bf16.mxu0 0
        %465 = vmatpush1.bf16.msra.mxu0 %v442
        %466 = vmatprep.subr.bf16.mxu0 0
        %467 = vmatpush1.bf16.msra.mxu0 %v443
        %468 = vmatprep.subr.bf16.mxu0 0
        %469 = vmatpush1.bf16.msra.mxu0 0
        %470 = vmatprep.subr.bf16.mxu0 0
        %471 = vmatpush1.bf16.msra.mxu0 0
        %472 = vmatprep.subr.bf16.mxu0 0
        %473 = vmatpush1.bf16.msra.mxu0 0
        %474 = vmatprep.subr.bf16.mxu0 0
        %475 = vmatpush1.bf16.msra.mxu0 0
        %476 = vmatprep.subr.bf16.mxu0 0
        %477 = vmatpush1.bf16.msra.mxu0 0
        %478 = vmatprep.subr.bf16.mxu0 0
        %479 = vmatpush1.bf16.msra.mxu0 0
        %480 = vmatprep.subr.bf16.mxu0 0
        %481 = vmatpush1.bf16.msra.mxu0 0
        %482 = vmatprep.subr.bf16.mxu0 0
        %483 = vmatpush1.bf16.msra.mxu0 0
        %484 = vmatprep.mubr.bf16.mxu0 0
        %485 = vmatmul.mubr.bf16.gmra.mrb[0].mxu0 %v388
        %v486 = vpop.f32.mrb[0].mxu0
        %v487 = vadd.f32 %v354, %v486
        %v488 = vpop.f32.mrb[0].mxu0
        %v489 = vpop.f32.mrb[0].mxu0
        %v490 = vadd.f32 %v354, %v489
        %v491 = vpop.f32.mrb[0].mxu0
        %492 = vmatprep.mubr.bf16.mxu0 0
        %493 = vmatmul.mubr.bf16.gmra.mrb[0].mxu0 %v389
        %v494 = vpop.f32.mrb[0].mxu0
        %v495 = vadd.f32 %v354, %v494
        %v496 = vpop.f32.mrb[0].mxu0
        %v497 = vpop.f32.mrb[0].mxu0
        %v498 = vadd.f32 %v354, %v497
        %v499 = vpop.f32.mrb[0].mxu0
        %500 = vmatprep.mubr.bf16.mxu0 0
        %501 = vmatmul.mubr.bf16.gmra.mrb[0].mxu0 %v390
        %v502 = vpop.f32.mrb[0].mxu0
        %v503 = vadd.f32 %v354, %v502
        %v504 = vpop.f32.mrb[0].mxu0
        %v505 = vpop.f32.mrb[0].mxu0
        %v506 = vadd.f32 %v354, %v505
        %v507 = vpop.f32.mrb[0].mxu0
        %508 = vmatprep.mubr.bf16.mxu0 0
        %509 = vmatmul.mubr.bf16.gmra.mrb[0].mxu0 %v391
        %v510 = vpop.f32.mrb[0].mxu0
        %v511 = vadd.f32 %v354, %v510
        %v512 = vpop.f32.mrb[0].mxu0
        %v513 = vpop.f32.mrb[0].mxu0
        %v514 = vadd.f32 %v354, %v513
        %v515 = vpop.f32.mrb[0].mxu0
        %516 = vmatprep.mubr.bf16.mxu0 0
        %517 = vmatmul.mubr.bf16.gmra.mrb[0].mxu0 %v392
        %v518 = vpop.f32.mrb[0].mxu0
        %v519 = vadd.f32 %v354, %v518
        %v520 = vpop.f32.mrb[0].mxu0
        %v521 = vpop.f32.mrb[0].mxu0
        %v522 = vadd.f32 %v354, %v521
        %v523 = vpop.f32.mrb[0].mxu0
        %524 = vmatprep.mubr.bf16.mxu0 0
        %525 = vmatmul.mubr.bf16.gmra.mrb[0].mxu0 %v393
        %v526 = vpop.f32.mrb[0].mxu0
        %v527 = vadd.f32 %v354, %v526
        %v528 = vpop.f32.mrb[0].mxu0
        %v529 = vpop.f32.mrb[0].mxu0
        %v530 = vadd.f32 %v354, %v529
        %v531 = vpop.f32.mrb[0].mxu0
        %532 = vmatprep.mubr.bf16.mxu0 0
        %533 = vmatmul.mubr.bf16.gmra.mrb[0].mxu0 %v394
        %v534 = vpop.f32.mrb[0].mxu0
        %v535 = vadd.f32 %v354, %v534
        %v536 = vpop.f32.mrb[0].mxu0
        %v537 = vpop.f32.mrb[0].mxu0
        %v538 = vadd.f32 %v354, %v537
        %v539 = vpop.f32.mrb[0].mxu0
        %540 = vmatprep.mubr.bf16.mxu0 0
        %541 = vmatmul.mubr.bf16.gmra.mrb[0].mxu0 %v395
        %v542 = vpop.f32.mrb[0].mxu0
        %v543 = vadd.f32 %v354, %v542
        %v544 = vpop.f32.mrb[0].mxu0
        %v545 = vpop.f32.mrb[0].mxu0
        %v546 = vadd.f32 %v354, %v545
        %v547 = vpop.f32.mrb[0].mxu0
        %548 = vdwg.mxu0
        %vm549 = vcmp.gt.f32.partialorder %v487, 0.0
        %vm550 = vcmp.gt.f32.partialorder %v490, 0.0
        %vm551 = vcmp.gt.f32.partialorder %v495, 0.0
        %vm552 = vcmp.gt.f32.partialorder %v498, 0.0
        %vm553 = vcmp.gt.f32.partialorder %v503, 0.0
        %vm554 = vcmp.gt.f32.partialorder %v506, 0.0
        %vm555 = vcmp.gt.f32.partialorder %v511, 0.0
        %vm556 = vcmp.gt.f32.partialorder %v514, 0.0
        %vm557 = vcmp.gt.f32.partialorder %v519, 0.0
        %vm558 = vcmp.gt.f32.partialorder %v522, 0.0
        %vm559 = vcmp.gt.f32.partialorder %v527, 0.0
        %vm560 = vcmp.gt.f32.partialorder %v530, 0.0
        %vm561 = vcmp.gt.f32.partialorder %v535, 0.0
        %vm562 = vcmp.gt.f32.partialorder %v538, 0.0
        %vm563 = vcmp.gt.f32.partialorder %v543, 0.0
        %vm564 = vcmp.gt.f32.partialorder %v546, 0.0
        %v565 = vmul.f32 %v487, 0.2
        %v566 = vmul.f32 %v490, 0.2
        %v567 = vmul.f32 %v495, 0.2
        %v568 = vmul.f32 %v498, 0.2
        %v569 = vmul.f32 %v503, 0.2
        %v570 = vmul.f32 %v506, 0.2
        %v571 = vmul.f32 %v511, 0.2
        %v572 = vmul.f32 %v514, 0.2
        %v573 = vmul.f32 %v519, 0.2
        %v574 = vmul.f32 %v522, 0.2
        %v575 = vmul.f32 %v527, 0.2
        %v576 = vmul.f32 %v530, 0.2
        %v577 = vmul.f32 %v535, 0.2
        %v578 = vmul.f32 %v538, 0.2
        %v579 = vmul.f32 %v543, 0.2
        %v580 = vmul.f32 %v546, 0.2
        %v581 = vsel %vm549, %v487, %v565
        %v582 = vsel %vm550, %v490, %v566
        %v583 = vsel %vm551, %v495, %v567
        %v584 = vsel %vm552, %v498, %v568
        %v585 = vsel %vm553, %v503, %v569
        %v586 = vsel %vm554, %v506, %v570
        %v587 = vsel %vm555, %v511, %v571
        %v588 = vsel %vm556, %v514, %v572
        %v589 = vsel %vm557, %v519, %v573
        %v590 = vsel %vm558, %v522, %v574
        %v591 = vsel %vm559, %v527, %v575
        %v592 = vsel %vm560, %v530, %v576
        %v593 = vsel %vm561, %v535, %v577
        %v594 = vsel %vm562, %v538, %v578
        %v595 = vsel %vm563, %v543, %v579
        %v596 = vsel %vm564, %v546, %v580
        %v597 = vpack.c.bf16 %v582, %v581
        %v598 = vpack.c.bf16 %v584, %v583
        %v599 = vpack.c.bf16 %v586, %v585
        %v600 = vpack.c.bf16 %v588, %v587
        %v601 = vpack.c.bf16 %v590, %v589
        %v602 = vpack.c.bf16 %v592, %v591
        %v603 = vpack.c.bf16 %v594, %v593
        %v604 = vpack.c.bf16 %v596, %v595
        %v605 = vld [vmem:[#allocation4] sm:$0xf]
        %v606 = vld [vmem:[#allocation4 + $0x4] sm:$0xf]
        %v607 = vld [vmem:[#allocation4 + $0x8] sm:$0xf]
        %v608 = vld [vmem:[#allocation4 + $0xc] sm:$0xf]
        %v609 = vld [vmem:[#allocation4 + $0x10] sm:$0xf]
        %v610 = vld [vmem:[#allocation4 + $0x14] sm:$0xf]
        %v611 = vld [vmem:[#allocation4 + $0x18] sm:$0xf]
        %v612 = vld [vmem:[#allocation4 + $0x1c] sm:$0xf]
        %v613 = vld [vmem:[#allocation4 + $0x20] sm:$0xf]
        %v614 = vld [vmem:[#allocation4 + $0x24] sm:$0xf]
        %v615 = vld [vmem:[#allocation4 + $0x28] sm:$0xf]
        %v616 = vld [vmem:[#allocation4 + $0x2c] sm:$0xf]
        %v617 = vld [vmem:[#allocation4 + $0x30] sm:$0xf]
        %v618 = vld [vmem:[#allocation4 + $0x34] sm:$0xf]
        %v619 = vld [vmem:[#allocation4 + $0x38] sm:$0xf]
        %v620 = vld [vmem:[#allocation4 + $0x3c] sm:$0xf]
        %v621 = vld [vmem:[%s4] sm:$0x1]
        %v623 = vlaneseq
        %v624 = vshrl.u32 %v623, 7
        %v625 = vsub.s32 0, %v624
        %v626 = vrot.slane %v621, %v625
        %v644 = vunpack.c.l.b16 %v605
        %v645 = vunpack.c.l.b16 %v606
        %v646 = vunpack.c.l.b16 %v607
        %v647 = vunpack.c.l.b16 %v608
        %v648 = vunpack.c.l.b16 %v609
        %v649 = vunpack.c.l.b16 %v610
        %v650 = vunpack.c.l.b16 %v611
        %v651 = vunpack.c.l.b16 %v612
        %v652 = vunpack.c.l.b16 %v613
        %v653 = vunpack.c.l.b16 %v614
        %v654 = vunpack.c.l.b16 %v615
        %v655 = vunpack.c.l.b16 %v616
        %v656 = vunpack.c.l.b16 %v617
        %v657 = vunpack.c.l.b16 %v618
        %v658 = vunpack.c.l.b16 %v619
        %v659 = vunpack.c.l.b16 %v620
        %v660 = vpack.c.b16 %v645, %v644
        %v661 = vpack.c.b16 %v647, %v646
        %v662 = vpack.c.b16 %v649, %v648
        %v663 = vpack.c.b16 %v651, %v650
        %v664 = vpack.c.b16 %v653, %v652
        %v665 = vpack.c.b16 %v655, %v654
        %v666 = vpack.c.b16 %v657, %v656
        %v667 = vpack.c.b16 %v659, %v658
        %676 = vmatprep.subr.bf16.mxu0 0
        %677 = vmatpush1.bf16.msra.mxu0 %v660
        %678 = vmatprep.subr.bf16.mxu0 0
        %679 = vmatpush1.bf16.msra.mxu0 %v661
        %680 = vmatprep.subr.bf16.mxu0 0
        %681 = vmatpush1.bf16.msra.mxu0 %v662
        %682 = vmatprep.subr.bf16.mxu0 0
        %683 = vmatpush1.bf16.msra.mxu0 %v663
        %684 = vmatprep.subr.bf16.mxu0 0
        %685 = vmatpush1.bf16.msra.mxu0 %v664
        %686 = vmatprep.subr.bf16.mxu0 0
        %687 = vmatpush1.bf16.msra.mxu0 %v665
        %688 = vmatprep.subr.bf16.mxu0 0
        %689 = vmatpush1.bf16.msra.mxu0 %v666
        %690 = vmatprep.subr.bf16.mxu0 0
        %691 = vmatpush1.bf16.msra.mxu0 %v667
        %692 = vmatprep.subr.bf16.mxu0 0
        %693 = vmatpush1.bf16.msra.mxu0 0
        %694 = vmatprep.subr.bf16.mxu0 0
        %695 = vmatpush1.bf16.msra.mxu0 0
        %696 = vmatprep.subr.bf16.mxu0 0
        %697 = vmatpush1.bf16.msra.mxu0 0
        %698 = vmatprep.subr.bf16.mxu0 0
        %699 = vmatpush1.bf16.msra.mxu0 0
        %700 = vmatprep.subr.bf16.mxu0 0
        %701 = vmatpush1.bf16.msra.mxu0 0
        %702 = vmatprep.subr.bf16.mxu0 0
        %703 = vmatpush1.bf16.msra.mxu0 0
        %704 = vmatprep.subr.bf16.mxu0 0
        %705 = vmatpush1.bf16.msra.mxu0 0
        %706 = vmatprep.subr.bf16.mxu0 0
        %707 = vmatpush1.bf16.msra.mxu0 0
        %708 = vmatprep.mubr.bf16.mxu0 0
        %709 = vmatmul.mubr.bf16.gmra.mrb[0].mxu0 %v597
        %v710 = vpop.f32.mrb[0].mxu0
        %v711 = vadd.f32 %v626, %v710
        %v712 = vpop.f32.mrb[0].mxu0
        %v713 = vpop.f32.mrb[0].mxu0
        %v714 = vadd.f32 %v626, %v713
        %v715 = vpop.f32.mrb[0].mxu0
        %716 = vmatprep.mubr.bf16.mxu0 0
        %717 = vmatmul.mubr.bf16.gmra.mrb[0].mxu0 %v598
        %v718 = vpop.f32.mrb[0].mxu0
        %v719 = vadd.f32 %v626, %v718
        %v720 = vpop.f32.mrb[0].mxu0
        %v721 = vpop.f32.mrb[0].mxu0
        %v722 = vadd.f32 %v626, %v721
        %v723 = vpop.f32.mrb[0].mxu0
        %724 = vmatprep.mubr.bf16.mxu0 0
        %725 = vmatmul.mubr.bf16.gmra.mrb[0].mxu0 %v599
        %v726 = vpop.f32.mrb[0].mxu0
        %v727 = vadd.f32 %v626, %v726
        %v728 = vpop.f32.mrb[0].mxu0
        %v729 = vpop.f32.mrb[0].mxu0
        %v730 = vadd.f32 %v626, %v729
        %v731 = vpop.f32.mrb[0].mxu0
        %732 = vmatprep.mubr.bf16.mxu0 0
        %733 = vmatmul.mubr.bf16.gmra.mrb[0].mxu0 %v600
        %v734 = vpop.f32.mrb[0].mxu0
        %v735 = vadd.f32 %v626, %v734
        %v736 = vpop.f32.mrb[0].mxu0
        %v737 = vpop.f32.mrb[0].mxu0
        %v738 = vadd.f32 %v626, %v737
        %v739 = vpop.f32.mrb[0].mxu0
        %740 = vmatprep.mubr.bf16.mxu0 0
        %741 = vmatmul.mubr.bf16.gmra.mrb[0].mxu0 %v601
        %v742 = vpop.f32.mrb[0].mxu0
        %v743 = vadd.f32 %v626, %v742
        %v744 = vpop.f32.mrb[0].mxu0
        %v745 = vpop.f32.mrb[0].mxu0
        %v746 = vadd.f32 %v626, %v745
        %v747 = vpop.f32.mrb[0].mxu0
        %748 = vmatprep.mubr.bf16.mxu0 0
        %749 = vmatmul.mubr.bf16.gmra.mrb[0].mxu0 %v602
        %v750 = vpop.f32.mrb[0].mxu0
        %v751 = vadd.f32 %v626, %v750
        %v752 = vpop.f32.mrb[0].mxu0
        %v753 = vpop.f32.mrb[0].mxu0
        %v754 = vadd.f32 %v626, %v753
        %v755 = vpop.f32.mrb[0].mxu0
        %756 = vmatprep.mubr.bf16.mxu0 0
        %757 = vmatmul.mubr.bf16.gmra.mrb[0].mxu0 %v603
        %v758 = vpop.f32.mrb[0].mxu0
        %v759 = vadd.f32 %v626, %v758
        %v760 = vpop.f32.mrb[0].mxu0
        %v761 = vpop.f32.mrb[0].mxu0
        %v762 = vadd.f32 %v626, %v761
        %v763 = vpop.f32.mrb[0].mxu0
        %764 = vmatprep.mubr.bf16.mxu0 0
        %765 = vmatmul.mubr.bf16.gmra.mrb[0].mxu0 %v604
        %v766 = vpop.f32.mrb[0].mxu0
        %v767 = vadd.f32 %v626, %v766
        %v768 = vpop.f32.mrb[0].mxu0
        %v769 = vpop.f32.mrb[0].mxu0
        %v770 = vadd.f32 %v626, %v769
        %v771 = vpop.f32.mrb[0].mxu0
        %772 = vdwg.mxu0
        %vm773 = vcmp.gt.f32.partialorder %v711, 0.0
        %vm774 = vcmp.gt.f32.partialorder %v714, 0.0
        %vm775 = vcmp.gt.f32.partialorder %v719, 0.0
        %vm776 = vcmp.gt.f32.partialorder %v722, 0.0
        %vm777 = vcmp.gt.f32.partialorder %v727, 0.0
        %vm778 = vcmp.gt.f32.partialorder %v730, 0.0
        %vm779 = vcmp.gt.f32.partialorder %v735, 0.0
        %vm780 = vcmp.gt.f32.partialorder %v738, 0.0
        %vm781 = vcmp.gt.f32.partialorder %v743, 0.0
        %vm782 = vcmp.gt.f32.partialorder %v746, 0.0
        %vm783 = vcmp.gt.f32.partialorder %v751, 0.0
        %vm784 = vcmp.gt.f32.partialorder %v754, 0.0
        %vm785 = vcmp.gt.f32.partialorder %v759, 0.0
        %vm786 = vcmp.gt.f32.partialorder %v762, 0.0
        %vm787 = vcmp.gt.f32.partialorder %v767, 0.0
        %vm788 = vcmp.gt.f32.partialorder %v770, 0.0
        %v789 = vmul.f32 %v711, 0.2
        %v790 = vmul.f32 %v714, 0.2
        %v791 = vmul.f32 %v719, 0.2
        %v792 = vmul.f32 %v722, 0.2
        %v793 = vmul.f32 %v727, 0.2
        %v794 = vmul.f32 %v730, 0.2
        %v795 = vmul.f32 %v735, 0.2
        %v796 = vmul.f32 %v738, 0.2
        %v797 = vmul.f32 %v743, 0.2
        %v798 = vmul.f32 %v746, 0.2
        %v799 = vmul.f32 %v751, 0.2
        %v800 = vmul.f32 %v754, 0.2
        %v801 = vmul.f32 %v759, 0.2
        %v802 = vmul.f32 %v762, 0.2
        %v803 = vmul.f32 %v767, 0.2
        %v804 = vmul.f32 %v770, 0.2
        %v805 = vsel %vm773, %v711, %v789
        %v806 = vsel %vm774, %v714, %v790
        %v807 = vsel %vm775, %v719, %v791
        %v808 = vsel %vm776, %v722, %v792
        %v809 = vsel %vm777, %v727, %v793
        %v810 = vsel %vm778, %v730, %v794
        %v811 = vsel %vm779, %v735, %v795
        %v812 = vsel %vm780, %v738, %v796
        %v813 = vsel %vm781, %v743, %v797
        %v814 = vsel %vm782, %v746, %v798
        %v815 = vsel %vm783, %v751, %v799
        %v816 = vsel %vm784, %v754, %v800
        %v817 = vsel %vm785, %v759, %v801
        %v818 = vsel %vm786, %v762, %v802
        %v819 = vsel %vm787, %v767, %v803
        %v820 = vsel %vm788, %v770, %v804
        %v821 = vpack.c.bf16 %v806, %v805
        %v822 = vpack.c.bf16 %v808, %v807
        %v823 = vpack.c.bf16 %v810, %v809
        %v824 = vpack.c.bf16 %v812, %v811
        %v825 = vpack.c.bf16 %v814, %v813
        %v826 = vpack.c.bf16 %v816, %v815
        %v827 = vpack.c.bf16 %v818, %v817
        %v828 = vpack.c.bf16 %v820, %v819
        %v829 = vld [vmem:[%s5] sm:$0xf]
        %v830 = vld [vmem:[%s5 + $0x4] sm:$0xf]
        %v831 = vld [vmem:[%s5 + $0x8] sm:$0xf]
        %v832 = vld [vmem:[%s5 + $0xc] sm:$0xf]
        %v833 = vld [vmem:[%s5 + $0x10] sm:$0xf]
        %v834 = vld [vmem:[%s5 + $0x14] sm:$0xf]
        %v835 = vld [vmem:[%s5 + $0x18] sm:$0xf]
        %v836 = vld [vmem:[%s5 + $0x1c] sm:$0xf]
        %v837 = vld [vmem:[%s5 + $0x20] sm:$0xf]
        %v838 = vld [vmem:[%s5 + $0x24] sm:$0xf]
        %v839 = vld [vmem:[%s5 + $0x28] sm:$0xf]
        %v840 = vld [vmem:[%s5 + $0x2c] sm:$0xf]
        %v841 = vld [vmem:[%s5 + $0x30] sm:$0xf]
        %v842 = vld [vmem:[%s5 + $0x34] sm:$0xf]
        %v843 = vld [vmem:[%s5 + $0x38] sm:$0xf]
        %v844 = vld [vmem:[%s5 + $0x3c] sm:$0xf]
        %v845 = vld [vmem:[%s6] sm:$0x1]
        %v847 = vlaneseq
        %v848 = vshrl.u32 %v847, 7
        %v849 = vsub.s32 0, %v848
        %v850 = vrot.slane %v845, %v849
        %v868 = vunpack.c.l.b16 %v829
        %v869 = vunpack.c.l.b16 %v830
        %v870 = vunpack.c.l.b16 %v831
        %v871 = vunpack.c.l.b16 %v832
        %v872 = vunpack.c.l.b16 %v833
        %v873 = vunpack.c.l.b16 %v834
        %v874 = vunpack.c.l.b16 %v835
        %v875 = vunpack.c.l.b16 %v836
        %v876 = vunpack.c.l.b16 %v837
        %v877 = vunpack.c.l.b16 %v838
        %v878 = vunpack.c.l.b16 %v839
        %v879 = vunpack.c.l.b16 %v840
        %v880 = vunpack.c.l.b16 %v841
        %v881 = vunpack.c.l.b16 %v842
        %v882 = vunpack.c.l.b16 %v843
        %v883 = vunpack.c.l.b16 %v844
        %v884 = vpack.c.b16 %v869, %v868
        %v885 = vpack.c.b16 %v871, %v870
        %v886 = vpack.c.b16 %v873, %v872
        %v887 = vpack.c.b16 %v875, %v874
        %v888 = vpack.c.b16 %v877, %v876
        %v889 = vpack.c.b16 %v879, %v878
        %v890 = vpack.c.b16 %v881, %v880
        %v891 = vpack.c.b16 %v883, %v882
        %900 = vmatprep.subr.bf16.mxu0 0
        %901 = vmatpush1.bf16.msra.mxu0 %v884
        %902 = vmatprep.subr.bf16.mxu0 0
        %903 = vmatpush1.bf16.msra.mxu0 %v885
        %904 = vmatprep.subr.bf16.mxu0 0
        %905 = vmatpush1.bf16.msra.mxu0 %v886
        %906 = vmatprep.subr.bf16.mxu0 0
        %907 = vmatpush1.bf16.msra.mxu0 %v887
        %908 = vmatprep.subr.bf16.mxu0 0
        %909 = vmatpush1.bf16.msra.mxu0 %v888
        %910 = vmatprep.subr.bf16.mxu0 0
        %911 = vmatpush1.bf16.msra.mxu0 %v889
        %912 = vmatprep.subr.bf16.mxu0 0
        %913 = vmatpush1.bf16.msra.mxu0 %v890
        %914 = vmatprep.subr.bf16.mxu0 0
        %915 = vmatpush1.bf16.msra.mxu0 %v891
        %916 = vmatprep.subr.bf16.mxu0 0
        %917 = vmatpush1.bf16.msra.mxu0 0
        %918 = vmatprep.subr.bf16.mxu0 0
        %919 = vmatpush1.bf16.msra.mxu0 0
        %920 = vmatprep.subr.bf16.mxu0 0
        %921 = vmatpush1.bf16.msra.mxu0 0
        %922 = vmatprep.subr.bf16.mxu0 0
        %923 = vmatpush1.bf16.msra.mxu0 0
        %924 = vmatprep.subr.bf16.mxu0 0
        %925 = vmatpush1.bf16.msra.mxu0 0
        %926 = vmatprep.subr.bf16.mxu0 0
        %927 = vmatpush1.bf16.msra.mxu0 0
        %928 = vmatprep.subr.bf16.mxu0 0
        %929 = vmatpush1.bf16.msra.mxu0 0
        %930 = vmatprep.subr.bf16.mxu0 0
        %931 = vmatpush1.bf16.msra.mxu0 0
        %932 = vmatprep.mubr.bf16.mxu0 0
        %933 = vmatmul.mubr.bf16.gmra.mrb[0].mxu0 %v821
        %v934 = vpop.f32.mrb[0].mxu0
        %v935 = vadd.f32 %v850, %v934
        %v936 = vpop.f32.mrb[0].mxu0
        %v937 = vpop.f32.mrb[0].mxu0
        %v938 = vadd.f32 %v850, %v937
        %v939 = vpop.f32.mrb[0].mxu0
        %940 = vmatprep.mubr.bf16.mxu0 0
        %941 = vmatmul.mubr.bf16.gmra.mrb[0].mxu0 %v822
        %v942 = vpop.f32.mrb[0].mxu0
        %v943 = vadd.f32 %v850, %v942
        %v944 = vpop.f32.mrb[0].mxu0
        %v945 = vpop.f32.mrb[0].mxu0
        %v946 = vadd.f32 %v850, %v945
        %v947 = vpop.f32.mrb[0].mxu0
        %948 = vmatprep.mubr.bf16.mxu0 0
        %949 = vmatmul.mubr.bf16.gmra.mrb[0].mxu0 %v823
        %v950 = vpop.f32.mrb[0].mxu0
        %v951 = vadd.f32 %v850, %v950
        %v952 = vpop.f32.mrb[0].mxu0
        %v953 = vpop.f32.mrb[0].mxu0
        %v954 = vadd.f32 %v850, %v953
        %v955 = vpop.f32.mrb[0].mxu0
        %956 = vmatprep.mubr.bf16.mxu0 0
        %957 = vmatmul.mubr.bf16.gmra.mrb[0].mxu0 %v824
        %v958 = vpop.f32.mrb[0].mxu0
        %v959 = vadd.f32 %v850, %v958
        %v960 = vpop.f32.mrb[0].mxu0
        %v961 = vpop.f32.mrb[0].mxu0
        %v962 = vadd.f32 %v850, %v961
        %v963 = vpop.f32.mrb[0].mxu0
        %964 = vmatprep.mubr.bf16.mxu0 0
        %965 = vmatmul.mubr.bf16.gmra.mrb[0].mxu0 %v825
        %v966 = vpop.f32.mrb[0].mxu0
        %v967 = vadd.f32 %v850, %v966
        %v968 = vpop.f32.mrb[0].mxu0
        %v969 = vpop.f32.mrb[0].mxu0
        %v970 = vadd.f32 %v850, %v969
        %v971 = vpop.f32.mrb[0].mxu0
        %972 = vmatprep.mubr.bf16.mxu0 0
        %973 = vmatmul.mubr.bf16.gmra.mrb[0].mxu0 %v826
        %v974 = vpop.f32.mrb[0].mxu0
        %v975 = vadd.f32 %v850, %v974
        %v976 = vpop.f32.mrb[0].mxu0
        %v977 = vpop.f32.mrb[0].mxu0
        %v978 = vadd.f32 %v850, %v977
        %v979 = vpop.f32.mrb[0].mxu0
        %980 = vmatprep.mubr.bf16.mxu0 0
        %981 = vmatmul.mubr.bf16.gmra.mrb[0].mxu0 %v827
        %v982 = vpop.f32.mrb[0].mxu0
        %v983 = vadd.f32 %v850, %v982
        %v984 = vpop.f32.mrb[0].mxu0
        %v985 = vpop.f32.mrb[0].mxu0
        %v986 = vadd.f32 %v850, %v985
        %v987 = vpop.f32.mrb[0].mxu0
        %988 = vmatprep.mubr.bf16.mxu0 0
        %989 = vmatmul.mubr.bf16.gmra.mrb[0].mxu0 %v828
        %v990 = vpop.f32.mrb[0].mxu0
        %v991 = vadd.f32 %v850, %v990
        %v992 = vpop.f32.mrb[0].mxu0
        %v993 = vpop.f32.mrb[0].mxu0
        %v994 = vadd.f32 %v850, %v993
        %v995 = vpop.f32.mrb[0].mxu0
        %996 = vdwg.mxu0
        %vm997 = vcmask 818176
        %998 = vst.msk [vmem:[%s314] sm:$0xff] %vm997, %v935
        %999 = vst.msk [vmem:[%s314 + $0x8] sm:$0xff] %vm997, %v938
        %1000 = vst.msk [vmem:[%s314 + $0x10] sm:$0xff] %vm997, %v943
        %1001 = vst.msk [vmem:[%s314 + $0x18] sm:$0xff] %vm997, %v946
        %1002 = vst.msk [vmem:[%s314 + $0x20] sm:$0xff] %vm997, %v951
        %1003 = vst.msk [vmem:[%s314 + $0x28] sm:$0xff] %vm997, %v954
        %1004 = vst.msk [vmem:[%s314 + $0x30] sm:$0xff] %vm997, %v959
        %1005 = vst.msk [vmem:[%s314 + $0x38] sm:$0xff] %vm997, %v962
        %1006 = vst.msk [vmem:[%s314 + $0x40] sm:$0xff] %vm997, %v967
        %1007 = vst.msk [vmem:[%s314 + $0x48] sm:$0xff] %vm997, %v970
        %1008 = vst.msk [vmem:[%s314 + $0x50] sm:$0xff] %vm997, %v975
        %1009 = vst.msk [vmem:[%s314 + $0x58] sm:$0xff] %vm997, %v978
        %1010 = vst.msk [vmem:[%s314 + $0x60] sm:$0xff] %vm997, %v983
        %1011 = vst.msk [vmem:[%s314 + $0x68] sm:$0xff] %vm997, %v986
        %1012 = vst.msk [vmem:[%s314 + $0x70] sm:$0xff] %vm997, %v991
        %1013 = vst.msk [vmem:[%s314 + $0x78] sm:$0xff] %vm997, %v994
        %s1014 = smul.u32 16, %s22
        %p1015 = scmp.lt.s32.totalorder %s1014, 31
        %s1016 = scalar_select %p1015, %s1014, 31
        %s1017 = smul.addr %s1016, 8
        %s1018 = scalar_lea.vmem %s7, %s1017
        // Predicated region
        $region57: #{tpu_custom_call.1} parent=47 // pred_check
          %p1019 = pneg %p192
        $region58: #{tpu_custom_call.1} parent=47 // pred_check_branch
          %1021 = sbr.rel (%p1019) target = $region60
        $region59: #{tpu_custom_call.1} parent=47 // pred_region
          %s1022 = smul.u32 16, %s22
        $region60: #{tpu_custom_call.1} parent=47 // pred_fallthru
          _
      $region48: #{tpu_custom_call.1} parent=5 // pred_fallthru
        _
      %p1023 = scmp.le.s32.totalorder 2, %s17
      // Predicated region
      $region61: #{tpu_custom_call.1} parent=5 // pred_check
        %p1024 = pneg %p1023
      $region62: #{tpu_custom_call.1} parent=5 // pred_check_branch
        %1026 = sbr.rel (%p1024) target = $region64
      $region63: #{tpu_custom_call.1} parent=5 // pred_region
        %s1027 = ssub.s32 %s17, 2
        // Predicated region
        $region65: #{tpu_custom_call.1} parent=63 // pred_check
          %p1028 = pneg %p198
        $region66: #{tpu_custom_call.1} parent=63 // pred_check_branch
          %1030 = sbr.rel (%p1028) target = $region68
        $region67: #{tpu_custom_call.1} parent=63 // pred_region
          %s1031 = smul.u32 16, %s23
          %p1032 = scmp.lt.s32.totalorder %s1031, 31
          %s1033 = scalar_select %p1032, %s1031, 31
          %s1034 = smul.addr %s1033, 8
          %s1035 = scalar_lea.vmem %s7, %s1034
        $region68: #{tpu_custom_call.1} parent=63 // pred_fallthru
          _
      $region64: #{tpu_custom_call.1} parent=5 // pred_fallthru
        _
    $region6: #{tpu_custom_call.1} parent=1 // loop_footer
      %s21 = sadd.s32 1, %s17
    $region7: #{tpu_custom_call.1} parent=1 // loop_footer_branch
      %16 = sbr.rel target = $region3
    $region8: #{tpu_custom_call.1} parent=1 // loop_exit
      _
    %1036 = vsyncpa [#allocation3], 1
    %s1037 = scalar_lea.sflag [#allocation3], 1
    %1038 = vsyncpa %s1037, 1
    %1039 = vsyncpa [#allocation5], 1

</llo_original>
